<compile_context>
chip_gen: v6e
topology: v6e:2x2x1
jax: 0.10.0
libtpu: 0.0.40
codegen_flags: <defaults>
</compile_context>

<pallas_src>
import functools

import jax
import jax.numpy as jnp
from jax.experimental import pallas as pl
from jax.experimental.pallas import tpu as pltpu

_LANES = 128
_SUBLANES = 8


def _pick_tile_rows_and_cores():
    """Generation-aware tile size (rows of 128 lanes) and megacore split."""
    kind = ""
    try:
        kind = jax.devices()[0].device_kind.lower()
    except Exception:  # defensive; the fallback below is safe everywhere
        pass
    if "v5" in kind:
        # v5e: 2 MiB f32 blocks already sit on the HBM roofline (~5 us DMA per
        # step >> 0.35 us grid overhead); stay under the 16 MiB scoped default.
        return 4096, 1
    # v6e / v7x (and unknown): 4 MiB f32 blocks halve per-step grid overhead.
    num_cores = 2 if ("v7" in kind or "7x" in kind) else 1
    return 8192, num_cores


def _focal_tversky_kernel(t_ref, p_ref, out_ref, acc_tp, acc_t, acc_p, *,
                          rows, tile_rows, tiles_per_core):
    c = pl.program_id(0)   # core ("parallel") axis
    i = pl.program_id(1)   # streaming ("arbitrary") axis
    start_row = (c * tiles_per_core + i) * tile_rows

    @pl.when(i == 0)
    def _init():
        acc_tp[...] = jnp.zeros_like(acc_tp)
        acc_t[...] = jnp.zeros_like(acc_t)
        acc_p[...] = jnp.zeros_like(acc_p)

    def _accumulate(t, p):
        # Reduce (tile_rows, 128) -> (8, 128): pure cross-vreg VALU adds.  The
        # final sublane/lane collapse to scalars happens once in the wrapper.
        tp8 = jnp.sum((t * p).reshape(-1, _SUBLANES, _LANES), axis=0)
        t8 = jnp.sum(t.reshape(-1, _SUBLANES, _LANES), axis=0)
        p8 = jnp.sum(p.reshape(-1, _SUBLANES, _LANES), axis=0)
        acc_tp[...] += tp8
        acc_t[...] += t8
        acc_p[...] += p8

    # Fast path: fully in-bounds tile, no masking work on the hot path.
    @pl.when(start_row + tile_rows <= rows)
    def _full_tile():
        _accumulate(t_ref[...].astype(jnp.float32),
                    p_ref[...].astype(jnp.float32))

    # Slow path: the single ragged last tile (zero out rows past the data
    # end).  Phantom tiles (start_row >= rows, clamped DMA) run neither path.
    @pl.when(jnp.logical_and(start_row < rows, start_row + tile_rows > rows))
    def _ragged_tile():
        t = t_ref[...].astype(jnp.float32)
        p = p_ref[...].astype(jnp.float32)
        valid = (jax.lax.broadcasted_iota(jnp.int32, t.shape, 0)
                 < (rows - start_row))
        _accumulate(jnp.where(valid, t, 0.0), jnp.where(valid, p, 0.0))

    # Flush the vreg-aligned accumulators to the output block once per core.
    @pl.when(i == tiles_per_core - 1)
    def _flush():
        out_ref[...] = jnp.stack(
            [acc_tp[...], acc_t[...], acc_p[...]], axis=0
        ).reshape(out_ref.shape)


def focal_tversky_loss(inp, target, smooth=1.0, alpha=0.9, gamma=1.0):
    """Matches FocalTverskyloss.forward(input, target). Returns a scalar f32.

    Preferred calling convention: pass `inp`/`target` in their native dtypes
    (f32 / bf16 / bool); the cast to f32 happens in-kernel.
    """
    p = jnp.ravel(inp)        # reshape only: no cast, no extra HBM pass
    t = jnp.ravel(target)
    n = p.shape[0]

    # Pad (rarely needed) so rows is a multiple of 8 -> every tile is a whole
    # number of vregs.  Zero padding is exact for sum(t*p), sum(t), sum(p).
    pad = (-n) % (_SUBLANES * _LANES)
    if pad:
        p = jnp.pad(p, (0, pad))
        t = jnp.pad(t, (0, pad))
    rows = (n + pad) // _LANES
    p2 = p.reshape(rows, _LANES)
    t2 = t.reshape(rows, _LANES)

    max_tile_rows, num_cores = _pick_tile_rows_and_cores()
    tile_rows = rows if rows <= max_tile_rows else max_tile_rows
    total_tiles = pl.cdiv(rows, tile_rows)
    num_cores = max(1, min(num_cores, total_tiles))
    tiles_per_core = pl.cdiv(total_tiles, num_cores)

    def in_map(c, i):
        # Clamp so a (rare, v7x-only) phantom tile's DMA stays in-bounds; its
        # compute is skipped in-kernel.
        return (jnp.minimum(c * tiles_per_core + i, total_tiles - 1), 0)

    kernel = functools.partial(
        _focal_tversky_kernel,
        rows=rows, tile_rows=tile_rows, tiles_per_core=tiles_per_core)

    in_bytes = rows * _LANES * (t2.dtype.itemsize + p2.dtype.itemsize)
    out_bytes = num_cores * 3 * _SUBLANES * _LANES * 4
    # 2 inputs x 2 pipeline buffers x tile, plus headroom for scratch / output
    # / compiler internals.  Never below the smallest (v5e) scoped default.
    tile_bytes = tile_rows * _LANES * (t2.dtype.itemsize + p2.dtype.itemsize)
    vmem_limit = max(2 * tile_bytes + (4 << 20), 16 << 20)

    partials = pl.pallas_call(
        kernel,
        out_shape=jax.ShapeDtypeStruct((num_cores, 3, _SUBLANES, _LANES),
                                       jnp.float32),
        grid=(num_cores, tiles_per_core),
        in_specs=[
            pl.BlockSpec((tile_rows, _LANES), in_map),
            pl.BlockSpec((tile_rows, _LANES), in_map),
        ],
        out_specs=pl.BlockSpec((1, 3, _SUBLANES, _LANES),
                               lambda c, i: (c, 0, 0, 0)),
        scratch_shapes=[pltpu.VMEM((_SUBLANES, _LANES), jnp.float32)] * 3,
        compiler_params=pltpu.CompilerParams(
            dimension_semantics=("parallel", "arbitrary"),
            vmem_limit_bytes=int(vmem_limit),
        ),
        cost_estimate=pl.CostEstimate(
            flops=int(5 * rows * _LANES),
            transcendentals=0,
            bytes_accessed=int(in_bytes + out_bytes),
        ),
    )(t2, p2)

    # Tiny scalar epilogue (combine per-core / per-sublane / per-lane sums).
    sums = jnp.sum(partials, axis=(0, 2, 3))   # [sum(t*p), sum(t), sum(p)]
    true_pos = sums[0]
    # For in-range inputs (t, p in [0, 1]) these are analytically >= 0; the
    # clamp only absorbs f32 rounding from the re-associated accumulation so
    # a non-integer gamma cannot NaN.  NOTE: for out-of-range inputs this is
    # a documented semantic difference from PyTorch (which can yield NaN or
    # signed values when tversky > 1).
    false_neg = jnp.maximum(sums[1] - true_pos, 0.0)
    false_pos = jnp.maximum(sums[2] - true_pos, 0.0)
    tversky = (true_pos + smooth) / (
        true_pos + alpha * false_neg + (1.0 - alpha) * false_pos + smooth
    )
    return jnp.power(1.0 - tversky, gamma)


def _reference(inp, target, smooth=1.0, alpha=0.9, gamma=1.0):
    p = jnp.ravel(inp).astype(jnp.float32)
    t = jnp.ravel(target).astype(jnp.float32)
    true_pos = jnp.sum(t * p)
    false_neg = jnp.sum(t * (1.0 - p))
    false_pos = jnp.sum((1.0 - t) * p)
    tversky = (true_pos + smooth) / (
        true_pos + alpha * false_neg + (1.0 - alpha) * false_pos + smooth
    )
    return (1.0 - tversky) ** gamma


if __name__ == "__main__":
    key = jax.random.PRNGKey(0)
    k1, k2, k3, k4 = jax.random.split(key, 4)

    # Small NCHW shapes consistent with a segmentation loss.
    x = jax.nn.sigmoid(jax.random.normal(k1, (2, 4, 16, 16), dtype=jnp.float32))
    y = (jax.random.uniform(k2, (2, 4, 16, 16)) > 0.5).astype(jnp.float32)
    loss = jax.block_until_ready(focal_tversky_loss(x, y))
    ref = jax.block_until_ready(_reference(x, y))
    assert jnp.allclose(loss, ref, rtol=1e-5, atol=1e-6), (loss, ref)

    # Exercise the pad path (element count not a multiple of 8*128).
    x2 = jax.nn.sigmoid(jax.random.normal(k3, (2, 3, 13, 16), dtype=jnp.float32))
    y2 = (jax.random.uniform(k4, (2, 3, 13, 16)) > 0.5).astype(jnp.float32)
    loss2 = jax.block_until_ready(focal_tversky_loss(x2, y2))
    ref2 = jax.block_until_ready(_reference(x2, y2))
    assert jnp.allclose(loss2, ref2, rtol=1e-5, atol=1e-6), (loss2, ref2)

    print("KERNEL_OK")
</pallas_src>

<mosaic_0001>
module attributes {stable_mosaic.version = 11 : i64} {
  func.func @_focal_tversky_kernel(%arg0: i32, %arg1: i32, %arg2: memref<16x128xf32, #tpu.memory_space<vmem>>, %arg3: memref<16x128xf32, #tpu.memory_space<vmem>>, %arg4: memref<1x3x8x128xf32, #tpu.memory_space<vmem>>, %arg5: memref<8x128xf32, #tpu.memory_space<vmem>>, %arg6: memref<8x128xf32, #tpu.memory_space<vmem>>, %arg7: memref<8x128xf32, #tpu.memory_space<vmem>>) attributes {dimension_semantics = [#tpu.dimension_semantics<parallel>, #tpu.dimension_semantics<arbitrary>], iteration_bounds = array<i64: 1, 1>, scalar_prefetch = 0 : i64, scratch_operands = 3 : i64, tpu.core_type = #tpu.core_type<tc>, window_params = [{transform_indices = @transform_0, window_bounds = array<i64: 16, 128>}, {transform_indices = @transform_1, window_bounds = array<i64: 16, 128>}, {transform_indices = @transform_2, window_bounds = array<i64: 1, 3, 8, 128>}]} {
    %c1_i32 = arith.constant 1 : i32
    %0 = arith.muli %arg0, %c1_i32 : i32
    %1 = arith.addi %0, %arg1 : i32
    %c16_i32 = arith.constant 16 : i32
    %2 = arith.muli %1, %c16_i32 : i32
    %c0_i32 = arith.constant 0 : i32
    %3 = arith.cmpi eq, %arg1, %c0_i32 : i32
    %4 = arith.extui %3 : i1 to i32
    %c0_i32_0 = arith.constant 0 : i32
    %5 = arith.cmpi ne, %4, %c0_i32_0 : i32
    scf.if %5 {
      %cst = arith.constant 0.000000e+00 : f32
      %19 = vector.broadcast %cst : f32 to vector<8x128xf32>
      %c0 = arith.constant 0 : index
      %c0_10 = arith.constant 0 : index
      %20 = vector.load %arg5[%c0, %c0_10] : memref<8x128xf32, #tpu.memory_space<vmem>>, vector<8x128xf32>
      tpu.vector_store %arg5[%c0, %c0_10], %19 {strides = array<i32>} : memref<8x128xf32, #tpu.memory_space<vmem>>, vector<8x128xf32>,
      %cst_11 = arith.constant 0.000000e+00 : f32
      %21 = vector.broadcast %cst_11 : f32 to vector<8x128xf32>
      %c0_12 = arith.constant 0 : index
      %c0_13 = arith.constant 0 : index
      %22 = vector.load %arg6[%c0_12, %c0_13] : memref<8x128xf32, #tpu.memory_space<vmem>>, vector<8x128xf32>
      tpu.vector_store %arg6[%c0_12, %c0_13], %21 {strides = array<i32>} : memref<8x128xf32, #tpu.memory_space<vmem>>, vector<8x128xf32>,
      %cst_14 = arith.constant 0.000000e+00 : f32
      %23 = vector.broadcast %cst_14 : f32 to vector<8x128xf32>
      %c0_15 = arith.constant 0 : index
      %c0_16 = arith.constant 0 : index
      %24 = vector.load %arg7[%c0_15, %c0_16] : memref<8x128xf32, #tpu.memory_space<vmem>>, vector<8x128xf32>
      tpu.vector_store %arg7[%c0_15, %c0_16], %23 {strides = array<i32>} : memref<8x128xf32, #tpu.memory_space<vmem>>, vector<8x128xf32>,
    } else {
    }
    %c16_i32_1 = arith.constant 16 : i32
    %6 = arith.addi %2, %c16_i32_1 : i32
    %c16_i32_2 = arith.constant 16 : i32
    %7 = arith.cmpi sle, %6, %c16_i32_2 : i32
    %8 = arith.extui %7 : i1 to i32
    %c0_i32_3 = arith.constant 0 : i32
    %9 = arith.cmpi ne, %8, %c0_i32_3 : i32
    scf.if %9 {
      %c0 = arith.constant 0 : index
      %c0_10 = arith.constant 0 : index
      %19 = vector.load %arg2[%c0, %c0_10] : memref<16x128xf32, #tpu.memory_space<vmem>>, vector<16x128xf32>
      %c0_11 = arith.constant 0 : index
      %c0_12 = arith.constant 0 : index
      %20 = vector.load %arg3[%c0_11, %c0_12] : memref<16x128xf32, #tpu.memory_space<vmem>>, vector<16x128xf32>
      %21 = arith.mulf %19, %20 : vector<16x128xf32>
      %22 = vector.shape_cast %21 : vector<16x128xf32> to vector<2x8x128xf32>
      %cst = arith.constant dense<0.000000e+00> : vector<8x128xf32>
      %23 = vector.multi_reduction <add>, %22, %cst [0] : vector<2x8x128xf32> to vector<8x128xf32>
      %24 = vector.shape_cast %19 : vector<16x128xf32> to vector<2x8x128xf32>
      %cst_13 = arith.constant dense<0.000000e+00> : vector<8x128xf32>
      %25 = vector.multi_reduction <add>, %24, %cst_13 [0] : vector<2x8x128xf32> to vector<8x128xf32>
      %26 = vector.shape_cast %20 : vector<16x128xf32> to vector<2x8x128xf32>
      %cst_14 = arith.constant dense<0.000000e+00> : vector<8x128xf32>
      %27 = vector.multi_reduction <add>, %26, %cst_14 [0] : vector<2x8x128xf32> to vector<8x128xf32>
      %c0_15 = arith.constant 0 : index
      %c0_16 = arith.constant 0 : index
      %28 = vector.load %arg5[%c0_15, %c0_16] : memref<8x128xf32, #tpu.memory_space<vmem>>, vector<8x128xf32>
      %29 = arith.addf %28, %23 : vector<8x128xf32>
      %c0_17 = arith.constant 0 : index
      %c0_18 = arith.constant 0 : index
      %30 = vector.load %arg5[%c0_17, %c0_18] : memref<8x128xf32, #tpu.memory_space<vmem>>, vector<8x128xf32>
      tpu.vector_store %arg5[%c0_17, %c0_18], %29 {strides = array<i32>} : memref<8x128xf32, #tpu.memory_space<vmem>>, vector<8x128xf32>,
      %c0_19 = arith.constant 0 : index
      %c0_20 = arith.constant 0 : index
      %31 = vector.load %arg6[%c0_19, %c0_20] : memref<8x128xf32, #tpu.memory_space<vmem>>, vector<8x128xf32>
      %32 = arith.addf %31, %25 : vector<8x128xf32>
      %c0_21 = arith.constant 0 : index
      %c0_22 = arith.constant 0 : index
      %33 = vector.load %arg6[%c0_21, %c0_22] : memref<8x128xf32, #tpu.memory_space<vmem>>, vector<8x128xf32>
      tpu.vector_store %arg6[%c0_21, %c0_22], %32 {strides = array<i32>} : memref<8x128xf32, #tpu.memory_space<vmem>>, vector<8x128xf32>,
      %c0_23 = arith.constant 0 : index
      %c0_24 = arith.constant 0 : index
      %34 = vector.load %arg7[%c0_23, %c0_24] : memref<8x128xf32, #tpu.memory_space<vmem>>, vector<8x128xf32>
      %35 = arith.addf %34, %27 : vector<8x128xf32>
      %c0_25 = arith.constant 0 : index
      %c0_26 = arith.constant 0 : index
      %36 = vector.load %arg7[%c0_25, %c0_26] : memref<8x128xf32, #tpu.memory_space<vmem>>, vector<8x128xf32>
      tpu.vector_store %arg7[%c0_25, %c0_26], %35 {strides = array<i32>} : memref<8x128xf32, #tpu.memory_space<vmem>>, vector<8x128xf32>,
    } else {
    }
    %c16_i32_4 = arith.constant 16 : i32
    %10 = arith.cmpi slt, %2, %c16_i32_4 : i32
    %c16_i32_5 = arith.constant 16 : i32
    %11 = arith.addi %2, %c16_i32_5 : i32
    %c16_i32_6 = arith.constant 16 : i32
    %12 = arith.cmpi sgt, %11, %c16_i32_6 : i32
    %13 = arith.andi %10, %12 : i1
    %14 = arith.extui %13 : i1 to i32
    %c0_i32_7 = arith.constant 0 : i32
    %15 = arith.cmpi ne, %14, %c0_i32_7 : i32
    scf.if %15 {
      %c0 = arith.constant 0 : index
      %c0_10 = arith.constant 0 : index
      %19 = vector.load %arg2[%c0, %c0_10] : memref<16x128xf32, #tpu.memory_space<vmem>>, vector<16x128xf32>
      %c0_11 = arith.constant 0 : index
      %c0_12 = arith.constant 0 : index
      %20 = vector.load %arg3[%c0_11, %c0_12] : memref<16x128xf32, #tpu.memory_space<vmem>>, vector<16x128xf32>
      %21 = tpu.iota {dimensions = array<i32: 0>} : vector<16x128xi32>
      %c16_i32_13 = arith.constant 16 : i32
      %22 = arith.subi %c16_i32_13, %2 : i32
      %23 = vector.broadcast %22 : i32 to vector<16x128xi32>
      %24 = arith.cmpi slt, %21, %23 : vector<16x128xi32>
      %cst = arith.constant 0.000000e+00 : f32
      %25 = vector.broadcast %cst : f32 to vector<16x128xf32>
      %26 = arith.select %24, %19, %25 : vector<16x128xi1>, vector<16x128xf32>
      %cst_14 = arith.constant 0.000000e+00 : f32
      %27 = vector.broadcast %cst_14 : f32 to vector<16x128xf32>
      %28 = arith.select %24, %20, %27 : vector<16x128xi1>, vector<16x128xf32>
      %29 = arith.mulf %26, %28 : vector<16x128xf32>
      %30 = vector.shape_cast %29 : vector<16x128xf32> to vector<2x8x128xf32>
      %cst_15 = arith.constant dense<0.000000e+00> : vector<8x128xf32>
      %31 = vector.multi_reduction <add>, %30, %cst_15 [0] : vector<2x8x128xf32> to vector<8x128xf32>
      %32 = vector.shape_cast %26 : vector<16x128xf32> to vector<2x8x128xf32>
      %cst_16 = arith.constant dense<0.000000e+00> : vector<8x128xf32>
      %33 = vector.multi_reduction <add>, %32, %cst_16 [0] : vector<2x8x128xf32> to vector<8x128xf32>
      %34 = vector.shape_cast %28 : vector<16x128xf32> to vector<2x8x128xf32>
      %cst_17 = arith.constant dense<0.000000e+00> : vector<8x128xf32>
      %35 = vector.multi_reduction <add>, %34, %cst_17 [0] : vector<2x8x128xf32> to vector<8x128xf32>
      %c0_18 = arith.constant 0 : index
      %c0_19 = arith.constant 0 : index
      %36 = vector.load %arg5[%c0_18, %c0_19] : memref<8x128xf32, #tpu.memory_space<vmem>>, vector<8x128xf32>
      %37 = arith.addf %36, %31 : vector<8x128xf32>
      %c0_20 = arith.constant 0 : index
      %c0_21 = arith.constant 0 : index
      %38 = vector.load %arg5[%c0_20, %c0_21] : memref<8x128xf32, #tpu.memory_space<vmem>>, vector<8x128xf32>
      tpu.vector_store %arg5[%c0_20, %c0_21], %37 {strides = array<i32>} : memref<8x128xf32, #tpu.memory_space<vmem>>, vector<8x128xf32>,
      %c0_22 = arith.constant 0 : index
      %c0_23 = arith.constant 0 : index
      %39 = vector.load %arg6[%c0_22, %c0_23] : memref<8x128xf32, #tpu.memory_space<vmem>>, vector<8x128xf32>
      %40 = arith.addf %39, %33 : vector<8x128xf32>
      %c0_24 = arith.constant 0 : index
      %c0_25 = arith.constant 0 : index
      %41 = vector.load %arg6[%c0_24, %c0_25] : memref<8x128xf32, #tpu.memory_space<vmem>>, vector<8x128xf32>
      tpu.vector_store %arg6[%c0_24, %c0_25], %40 {strides = array<i32>} : memref<8x128xf32, #tpu.memory_space<vmem>>, vector<8x128xf32>,
      %c0_26 = arith.constant 0 : index
      %c0_27 = arith.constant 0 : index
      %42 = vector.load %arg7[%c0_26, %c0_27] : memref<8x128xf32, #tpu.memory_space<vmem>>, vector<8x128xf32>
      %43 = arith.addf %42, %35 : vector<8x128xf32>
      %c0_28 = arith.constant 0 : index
      %c0_29 = arith.constant 0 : index
      %44 = vector.load %arg7[%c0_28, %c0_29] : memref<8x128xf32, #tpu.memory_space<vmem>>, vector<8x128xf32>
      tpu.vector_store %arg7[%c0_28, %c0_29], %43 {strides = array<i32>} : memref<8x128xf32, #tpu.memory_space<vmem>>, vector<8x128xf32>,
    } else {
    }
    %c0_i32_8 = arith.constant 0 : i32
    %16 = arith.cmpi eq, %arg1, %c0_i32_8 : i32
    %17 = arith.extui %16 : i1 to i32
    %c0_i32_9 = arith.constant 0 : i32
    %18 = arith.cmpi ne, %17, %c0_i32_9 : i32
    scf.if %18 {
      %c0 = arith.constant 0 : index
      %c0_10 = arith.constant 0 : index
      %19 = vector.load %arg5[%c0, %c0_10] : memref<8x128xf32, #tpu.memory_space<vmem>>, vector<8x128xf32>
      %c0_11 = arith.constant 0 : index
      %c0_12 = arith.constant 0 : index
      %20 = vector.load %arg6[%c0_11, %c0_12] : memref<8x128xf32, #tpu.memory_space<vmem>>, vector<8x128xf32>
      %c0_13 = arith.constant 0 : index
      %c0_14 = arith.constant 0 : index
      %21 = vector.load %arg7[%c0_13, %c0_14] : memref<8x128xf32, #tpu.memory_space<vmem>>, vector<8x128xf32>
      %22 = vector.shape_cast %19 : vector<8x128xf32> to vector<1x8x128xf32>
      %23 = vector.shape_cast %20 : vector<8x128xf32> to vector<1x8x128xf32>
      %24 = vector.shape_cast %21 : vector<8x128xf32> to vector<1x8x128xf32>
      %25 = tpu.concatenate %22, %23, %24 in 0 : vector<1x8x128xf32>, vector<1x8x128xf32>, vector<1x8x128xf32> -> vector<3x8x128xf32>
      %26 = vector.shape_cast %25 : vector<3x8x128xf32> to vector<1x3x8x128xf32>
      %c0_15 = arith.constant 0 : index
      %c0_16 = arith.constant 0 : index
      %c0_17 = arith.constant 0 : index
      %c0_18 = arith.constant 0 : index
      %27 = vector.load %arg4[%c0_15, %c0_16, %c0_17, %c0_18] : memref<1x3x8x128xf32, #tpu.memory_space<vmem>>, vector<1x3x8x128xf32>
      tpu.vector_store %arg4[%c0_15, %c0_16, %c0_17, %c0_18], %26 {strides = array<i32>} : memref<1x3x8x128xf32, #tpu.memory_space<vmem>>, vector<1x3x8x128xf32>,
    } else {
    }
    return
  }
  func.func @transform_0(%arg0: i32, %arg1: i32) -> (i32, i32) {
    %c1_i32 = arith.constant 1 : i32
    %0 = arith.muli %arg0, %c1_i32 : i32
    %1 = arith.addi %0, %arg1 : i32
    %c0_i32 = arith.constant 0 : i32
    %2 = arith.minsi %1, %c0_i32 : i32
    %c0_i32_0 = arith.constant 0 : i32
    %c0_i32_1 = arith.constant 0 : i32
    return %2, %c0_i32_0 : i32, i32
  }
  func.func @transform_1(%arg0: i32, %arg1: i32) -> (i32, i32) {
    %c1_i32 = arith.constant 1 : i32
    %0 = arith.muli %arg0, %c1_i32 : i32
    %1 = arith.addi %0, %arg1 : i32
    %c0_i32 = arith.constant 0 : i32
    %2 = arith.minsi %1, %c0_i32 : i32
    %c0_i32_0 = arith.constant 0 : i32
    %c0_i32_1 = arith.constant 0 : i32
    return %2, %c0_i32_0 : i32, i32
  }
  func.func @transform_2(%arg0: i32, %arg1: i32) -> (i32, i32, i32, i32) {
    %c0_i32 = arith.constant 0 : i32
    %c0_i32_0 = arith.constant 0 : i32
    %c0_i32_1 = arith.constant 0 : i32
    %c0_i32_2 = arith.constant 0 : i32
    return %arg0, %c0_i32, %c0_i32_0, %c0_i32_1 : i32, i32, i32, i32
  }
}

</mosaic_0001>

<llo_original>
// kernel: tpu_custom_call.1
$region0: #{tpu_custom_call.1}
  #allocation0 [shape = 'u32[]', space=smem, size = 0x4, offset = 0x4, fixed_abs, tag = 'smem constant byte address 0x4 - core index']
  #allocation1 [shape = 'u32[144,128]{1,0:T(1,128)}', space=vmem, size = 0x12000, scoped, tag = 'internal scratch']
  #allocation2 [shape = 'f32[8,128]{1,0:T(8,128)}', space=vmem, size = 0x1000, scoped, tag = 'scratch operand']
  #allocation3 [shape = 'f32[8,128]{1,0:T(8,128)}', space=vmem, size = 0x1000, scoped, tag = 'scratch operand']
  #allocation4 [shape = 'f32[8,128]{1,0:T(8,128)}', space=vmem, size = 0x1000, scoped, tag = 'scratch operand']
  %s0 = inlined_call_operand.hbm [shape: f32[16,128], index: 0, kind: input, shape index: {}]
  %s1 = inlined_call_operand.hbm [shape: f32[16,128], index: 1, kind: input, shape index: {}]
  %s2 = inlined_call_operand.hbm [shape: f32[1,3,8,128], index: 2, kind: output, shape index: {}]
  %s3 = sld [smem:[#allocation0]]
  $region42: #{tpu_custom_call.1} parent=0
    _
  %s5 = ssub.s32 1, %s3
  %s6 = scalar_select 0, %s5, %s3
  $region1: #{tpu_custom_call.1} parent=0
    #allocation5 [shape = 'u8[8192]{0}', space=vmem, size = 0x2000, scoped, tag = 'input window, operand 0, single buffered']
    #allocation6 [shape = 's32[1]{0}', space=sflag, size = 0x4, scoped, tag = 'scoped memory for tpu_custom_call.1']
    #allocation7 [shape = 's32[1]{0}', space=sflag, size = 0x4, scoped, tag = 'scoped memory for tpu_custom_call.1']
    #allocation8 [shape = 'u8[8192]{0}', space=vmem, size = 0x2000, scoped, tag = 'input window, operand 1, single buffered']
    #allocation9 [shape = 's32[1]{0}', space=sflag, size = 0x4, scoped, tag = 'scoped memory for tpu_custom_call.1']
    #allocation10 [shape = 'u8[12288]{0}', space=vmem, size = 0x3000, scoped, tag = 'output window, operand 0, single buffered']
    %7 = vsyncpa [#allocation6], 0
    %8 = vsyncpa [#allocation9], 0
    %9 = vsyncpa [#allocation7], 0
    // Predicated region
    $region2: #{tpu_custom_call.1} parent=1 // pred_check
      _
    $region3: #{tpu_custom_call.1} parent=1 // pred_check_branch
      %11 = sbr.rel (0) target = $region5
    $region4: #{tpu_custom_call.1} parent=1 // pred_region
      %s12 = sadd.s32 0, 0
      %p13 = scmp.lt.s32.totalorder %s12, 0
      %s14 = scalar_select %p13, %s12, 0
      %s15 = smul.u32 2, %s14
      %s17 = ssub.s32 256, 256
      %18 = vsyncadd [#allocation6], %s17
      %s19 = smul.addr %s15, 128
      %s20 = scalar_lea.hbm %s0, %s19
      %s21 = sshll.u32 [#allocation5], 4
      %s22 = int_to_ptr.vmem [resolvable:$true] %s21
      %27 = dma.hbm_to_vmem [thread:$0]  %s20, 256, %s22, [#allocation6], 128, 128, 8
    $region5: #{tpu_custom_call.1} parent=1 // pred_fallthru
      _
    // Predicated region
    $region6: #{tpu_custom_call.1} parent=1 // pred_check
      _
    $region7: #{tpu_custom_call.1} parent=1 // pred_check_branch
      %29 = sbr.rel (0) target = $region9
    $region8: #{tpu_custom_call.1} parent=1 // pred_region
      %s30 = sadd.s32 0, 0
      %p31 = scmp.lt.s32.totalorder %s30, 0
      %s32 = scalar_select %p31, %s30, 0
      %s33 = smul.u32 2, %s32
      %s35 = ssub.s32 256, 256
      %36 = vsyncadd [#allocation9], %s35
      %s37 = smul.addr %s33, 128
      %s38 = scalar_lea.hbm %s1, %s37
      %s39 = sshll.u32 [#allocation8], 4
      %s40 = int_to_ptr.vmem [resolvable:$true] %s39
      %45 = dma.hbm_to_vmem [thread:$0]  %s38, 256, %s40, [#allocation9], 128, 128, 8
    $region9: #{tpu_custom_call.1} parent=1 // pred_fallthru
      _
    // Predicated region
    $region10: #{tpu_custom_call.1} parent=1 // pred_check
      _
    $region11: #{tpu_custom_call.1} parent=1 // pred_check_branch
      %47 = sbr.rel (0) target = $region13
    $region12: #{tpu_custom_call.1} parent=1 // pred_region
      %48 = dma.done [#allocation6], 256
    $region13: #{tpu_custom_call.1} parent=1 // pred_fallthru
      _
    // Predicated region
    $region14: #{tpu_custom_call.1} parent=1 // pred_check
      _
    $region15: #{tpu_custom_call.1} parent=1 // pred_check_branch
      %50 = sbr.rel (0) target = $region17
    $region16: #{tpu_custom_call.1} parent=1 // pred_region
      %51 = dma.done [#allocation9], 256
    $region17: #{tpu_custom_call.1} parent=1 // pred_fallthru
      _
    %s52 = sadd.s32 0, 0
    %p53 = scmp.lt.s32.totalorder %s52, 0
    %s54 = scalar_select %p53, %s52, 0
    %s55 = smul.u32 2, %s54
    %s56 = sadd.s32 0, 0
    %p57 = scmp.lt.s32.totalorder %s56, 0
    %s58 = scalar_select %p57, %s56, 0
    %s59 = smul.u32 2, %s58
    %s60 = sadd.s32 0, 0
    %s61 = smul.u32 %s60, 16
    %p62 = scmp.eq.s32.totalorder 0, 0
    // Predicated region
    $region18: #{tpu_custom_call.1} parent=1 // pred_check
      %p63 = pneg %p62
    $region19: #{tpu_custom_call.1} parent=1 // pred_check_branch
      %65 = sbr.rel (%p63) target = $region21
    $region20: #{tpu_custom_call.1} parent=1 // pred_region
      %66 = vst [vmem:[#allocation2] sm:$0xff] 0.0
      %67 = vst [vmem:[#allocation3] sm:$0xff] 0.0
      %68 = vst [vmem:[#allocation4] sm:$0xff] 0.0
    $region21: #{tpu_custom_call.1} parent=1 // pred_fallthru
      _
    %s69 = sadd.s32 %s61, 16
    %p70 = scmp.le.s32.totalorder %s69, 16
    // Predicated region
    $region22: #{tpu_custom_call.1} parent=1 // pred_check
      %p71 = pneg %p70
    $region23: #{tpu_custom_call.1} parent=1 // pred_check_branch
      %73 = sbr.rel (%p71) target = $region25
    $region24: #{tpu_custom_call.1} parent=1 // pred_region
      %v74 = vld [vmem:[#allocation5] sm:$0xff]
      %v75 = vld [vmem:[#allocation5 + $0x8] sm:$0xff]
      %v76 = vld [vmem:[#allocation8] sm:$0xff]
      %v77 = vld [vmem:[#allocation8 + $0x8] sm:$0xff]
      %v78 = vmul.f32 %v74, %v76
      %v79 = vmul.f32 %v75, %v77
      %v80 = vadd.f32 %v78, %v79
      %v81 = vadd.f32 %v74, %v75
      %v82 = vadd.f32 %v76, %v77
      %v83 = vld [vmem:[#allocation2] sm:$0xff]
      %v84 = vadd.f32 %v83, %v80
      %85 = vst [vmem:[#allocation2] sm:$0xff] %v84
      %v86 = vld [vmem:[#allocation3] sm:$0xff]
      %v87 = vadd.f32 %v86, %v81
      %88 = vst [vmem:[#allocation3] sm:$0xff] %v87
      %v89 = vld [vmem:[#allocation4] sm:$0xff]
      %v90 = vadd.f32 %v89, %v82
      %91 = vst [vmem:[#allocation4] sm:$0xff] %v90
    $region25: #{tpu_custom_call.1} parent=1 // pred_fallthru
      _
    %p92 = scmp.lt.s32.totalorder %s61, 16
    %p93 = scmp.gt.s32.totalorder %s69, 16
    %p94 = pnand %p92, %p93
    %p95 = pneg %p94
    // Predicated region
    $region26: #{tpu_custom_call.1} parent=1 // pred_check
      _
    $region27: #{tpu_custom_call.1} parent=1 // pred_check_branch
      %97 = sbr.rel (%p94) target = $region29
    $region28: #{tpu_custom_call.1} parent=1 // pred_region
      %v98 = vld [vmem:[#allocation5] sm:$0xff]
      %v99 = vld [vmem:[#allocation5 + $0x8] sm:$0xff]
      %v100 = vld [vmem:[#allocation8] sm:$0xff]
      %v101 = vld [vmem:[#allocation8 + $0x8] sm:$0xff]
      %v102 = vlaneseq
      %v103 = vshrl.u32 %v102, 7
      %v104 = vadd.s32 %v103, 8
      %s105 = ssub.s32 16, %s61
      %v106 = vstv %s105
      %vm107 = vcmp.lt.s32.totalorder %v103, %v106
      %vm108 = vcmp.lt.s32.totalorder %v104, %v106
      %v109 = vsel %vm107, %v98, 0.0
      %v110 = vsel %vm108, %v99, 0.0
      %v111 = vsel %vm107, %v100, 0.0
      %v112 = vsel %vm108, %v101, 0.0
      %v113 = vmul.f32 %v109, %v111
      %v114 = vmul.f32 %v110, %v112
      %v115 = vadd.f32 %v113, %v114
      %v116 = vadd.f32 %v109, %v110
      %v117 = vadd.f32 %v111, %v112
      %v118 = vld [vmem:[#allocation2] sm:$0xff]
      %v119 = vadd.f32 %v118, %v115
      %120 = vst [vmem:[#allocation2] sm:$0xff] %v119
      %v121 = vld [vmem:[#allocation3] sm:$0xff]
      %v122 = vadd.f32 %v121, %v116
      %123 = vst [vmem:[#allocation3] sm:$0xff] %v122
      %v124 = vld [vmem:[#allocation4] sm:$0xff]
      %v125 = vadd.f32 %v124, %v117
      %126 = vst [vmem:[#allocation4] sm:$0xff] %v125
    $region29: #{tpu_custom_call.1} parent=1 // pred_fallthru
      _
    // Predicated region
    $region30: #{tpu_custom_call.1} parent=1 // pred_check
      %p127 = pneg %p62
    $region31: #{tpu_custom_call.1} parent=1 // pred_check_branch
      %129 = sbr.rel (%p127) target = $region33
    $region32: #{tpu_custom_call.1} parent=1 // pred_region
      %v130 = vld [vmem:[#allocation2] sm:$0xff]
      %v131 = vld [vmem:[#allocation3] sm:$0xff]
      %v132 = vld [vmem:[#allocation4] sm:$0xff]
      %133 = vst [vmem:[#allocation10] sm:$0xff] %v130
      %134 = vst [vmem:[#allocation10 + $0x8] sm:$0xff] %v131
      %135 = vst [vmem:[#allocation10 + $0x10] sm:$0xff] %v132
    $region33: #{tpu_custom_call.1} parent=1 // pred_fallthru
      _
    // Predicated region
    $region34: #{tpu_custom_call.1} parent=1 // pred_check
      _
    $region35: #{tpu_custom_call.1} parent=1 // pred_check_branch
      %137 = sbr.rel (0) target = $region37
    $region36: #{tpu_custom_call.1} parent=1 // pred_region
      %s139 = ssub.s32 384, 384
      %140 = vsyncadd [#allocation7], %s139
      %s141 = sshll.u32 [#allocation10], 4
      %s142 = int_to_ptr.vmem [resolvable:$true] %s141
      %147 = dma.vmem_to_hbm [thread:$0]  %s142, 384, %s2, [#allocation7], 128, 128, 8
    $region37: #{tpu_custom_call.1} parent=1 // pred_fallthru
      _
    // Predicated region
    $region38: #{tpu_custom_call.1} parent=1 // pred_check
      _
    $region39: #{tpu_custom_call.1} parent=1 // pred_check_branch
      %149 = sbr.rel (0) target = $region41
    $region40: #{tpu_custom_call.1} parent=1 // pred_region
      %150 = dma.done [#allocation7], 384
    $region41: #{tpu_custom_call.1} parent=1 // pred_fallthru
      _
    %151 = vsyncpa [#allocation6], 1
    %152 = vsyncpa [#allocation9], 1
    %153 = vsyncpa [#allocation7], 1

</llo_original>
